<compile_context>
chip_gen: v6e
topology: v6e:2x2x1
jax: 0.10.0
libtpu: 0.0.40
codegen_flags: <defaults>
</compile_context>

<pallas_src>
import functools

import jax
import jax.numpy as jnp
from jax import lax
from jax.experimental import pallas as pl
from jax.experimental.pallas import tpu as pltpu

HOURS = 24 * 7


def _round_up(x, m):
    return (x + m - 1) // m * m


def _multi_embed_kernel(idx_ref, table_ref, o_ref, *, off_l, off_t, sub_rows):
    # idx_ref  : (tile, 3) int32 — columns [user, loc, time_raw]
    # table_ref: (v_tot, D) — [emb_u; emb_l; emb_t] concatenated, vocab-padded
    # o_ref    : (tile, D)
    table = table_ref[...]                # resident table, hoisted out of loop
    v_tot = table.shape[0]
    tile = o_ref.shape[0]

    # Chunk-invariant iota, hoisted (JAX does not CSE broadcast_in_dim).
    iota = lax.broadcasted_iota(jnp.int32, (sub_rows, v_tot), 1)

    # Static row chunks bound the multi-hot intermediate to (sub_rows, v_tot)
    # so it stays mostly in vregs instead of round-tripping VMEM.
    for c in range(tile // sub_rows):
        r0 = c * sub_rows                                    # static offset
        ids = idx_ref[r0:r0 + sub_rows, :]                   # (sub, 3) int32
        u = ids[:, 0:1]                                      # user ids
        l = ids[:, 1:2] + off_l                              # loc ids + offset
        # Functional equivalent of `traj[:,:,2] = (t - 1) % hours + 1`
        # (floor-mod, matching torch `%`), fused into the gather index.
        t = jnp.remainder(ids[:, 2:3] - 1, HOURS) + 1 + off_t
        # Valid ids hit disjoint vocab ranges -> OR of the three one-hots is
        # exactly the sum of the three gathers.
        hot = ((iota == u) | (iota == l) | (iota == t)).astype(table.dtype)
        # Single fused multi-hot gather+sum on the MXU.
        acc = jnp.dot(hot, table, preferred_element_type=jnp.float32)
        o_ref[r0:r0 + sub_rows, :] = acc.astype(o_ref.dtype)


def multi_embed(traj, emb_t, emb_l, emb_u, *, target_rows_per_tile=4096,
                sub_rows=256):
    """Pallas MultiEmbed forward.

    traj : (B, L, 3) int — columns [user, loc, time_raw]
    emb_t: (hours+1, D), emb_l: (n_loc+1, D), emb_u: (n_user+1, D)
    returns joint embedding of shape (B, L, D) in the tables' dtype.
    """
    B, L, C = traj.shape
    assert C == 3
    D = emb_t.shape[1]
    out_dtype = emb_t.dtype
    N = B * L

    # Fused table: concat raw tables on the vocab axis, pad the TOTAL vocab to
    # a multiple of 128 (smaller than padding each table separately).
    v_u, v_l, v_t = emb_u.shape[0], emb_l.shape[0], emb_t.shape[0]
    off_l, off_t = v_u, v_u + v_l
    v_raw = v_u + v_l + v_t
    v_tot = _round_up(v_raw, 128)
    table = jnp.concatenate([emb_u, emb_l, emb_t], axis=0)
    if v_tot != v_raw:
        table = jnp.pad(table, ((0, v_tot - v_raw), (0, 0)))

    # Row tiling: large tiles amortize the ~0.35us/grid-step overhead; the
    # in-kernel sub-chunking bounds the multi-hot intermediate.
    tile = min(target_rows_per_tile, _round_up(N, 8))
    sub = min(sub_rows, tile)
    tile = _round_up(tile, sub)
    # Prefer >=2 grid steps so ("parallel",) can use both TensorCores on v7x
    # (no-op on single-TC v5e/v6e).
    if _round_up(N, tile) // tile < 2 and N > 2 * sub:
        tile = _round_up((N + 1) // 2, sub)
    n_pad = _round_up(N, tile)

    # Pass traj straight through: (N, 3) int32, row-padded only when needed.
    idx = traj.reshape(N, 3).astype(jnp.int32)
    if n_pad != N:
        # Padded rows gather valid table rows and are sliced off below.
        idx = jnp.pad(idx, ((0, n_pad - N), (0, 0)))

    # Explicit VMEM budget (default scoped limit is only 16-32 MiB); capped at
    # 64 MiB = v7x physical VMEM.
    itm_tab = jnp.dtype(table.dtype).itemsize
    itm_out = jnp.dtype(out_dtype).itemsize
    lane = max(D, 128)
    vmem_est = (2 * tile * 128 * 4            # idx blocks (lane-padded), 2x buf
                + 2 * tile * lane * itm_out   # out blocks, 2x buffered
                + 2 * v_tot * lane * itm_tab  # resident table
                + 4 * sub * v_tot * 4         # multi-hot + compare temporaries
                + (8 << 20))                  # headroom / internal scratch
    vmem_limit = int(min(max(vmem_est, 32 << 20), 64 << 20))

    kernel = functools.partial(_multi_embed_kernel,
                               off_l=off_l, off_t=off_t, sub_rows=sub)

    out = pl.pallas_call(
        kernel,
        out_shape=jax.ShapeDtypeStruct((n_pad, D), out_dtype),
        grid_spec=pltpu.PrefetchScalarGridSpec(
            num_scalar_prefetch=0,
            grid=(n_pad // tile,),
            in_specs=[
                pl.BlockSpec((tile, 3), lambda i: (i, 0)),
                # Full-array block, constant index_map: DMA'd once and kept
                # resident across all grid steps.
                # TODO(synk): for very large vocabularies (table >> a few MiB)
                # add a vocab-tiled "arbitrary" grid axis (partial multi-hot
                # matmuls accumulated into the out block) or a DMA-gather path
                # instead of a resident VMEM table.
                pl.BlockSpec((v_tot, D), lambda i: (0, 0)),
            ],
            out_specs=pl.BlockSpec((tile, D), lambda i: (i, 0)),
        ),
        compiler_params=pltpu.CompilerParams(
            dimension_semantics=("parallel",),
            vmem_limit_bytes=vmem_limit,
        ),
    )(idx, table)

    return out[:N].reshape(B, L, D)


if __name__ == "__main__":
    # Small shapes consistent with the module: batch=2, seq=8, emb_size=128
    # (emb_size a multiple of 128 so every output store is a full-width vst).
    B, L = 2, 8
    n_user, n_loc = 50, 200
    emb_size = 128

    key = jax.random.PRNGKey(0)
    k_u_ids, k_l_ids, k_t_ids, k_t, k_l, k_u = jax.random.split(key, 6)

    user = jax.random.randint(k_u_ids, (B, L), 1, n_user + 1)
    loc = jax.random.randint(k_l_ids, (B, L), 1, n_loc + 1)
    time_raw = jax.random.randint(k_t_ids, (B, L), 1, 1000)
    traj = jnp.stack([user, loc, time_raw], axis=-1).astype(jnp.int32)

    # Deterministic embedding tables (stand-ins for nn.Embedding weights).
    emb_t = jax.random.normal(k_t, (HOURS + 1, emb_size), jnp.float32)
    emb_l = jax.random.normal(k_l, (n_loc + 1, emb_size), jnp.float32)
    emb_u = jax.random.normal(k_u, (n_user + 1, emb_size), jnp.float32)

    out = multi_embed(traj, emb_t, emb_l, emb_u)
    out = jax.block_until_ready(out)

    # Pure-JAX reference (same semantics as the PyTorch forward).
    t_idx_ref = (traj[:, :, 2] - 1) % HOURS + 1
    ref = emb_t[t_idx_ref] + emb_l[traj[:, :, 1]] + emb_u[traj[:, :, 0]]

    assert out.shape == (B, L, emb_size)
    assert jnp.allclose(out, ref, atol=1e-5, rtol=1e-5), "mismatch vs reference"

    print("KERNEL_OK")
</pallas_src>

<mosaic_0001>
module attributes {stable_mosaic.version = 11 : i64} {
  func.func @_multi_embed_kernel(%arg0: i32, %arg1: memref<16x3xi32, #tpu.memory_space<vmem>>, %arg2: memref<512x128xf32, #tpu.memory_space<vmem>>, %arg3: memref<16x128xf32, #tpu.memory_space<vmem>>) attributes {dimension_semantics = [#tpu.dimension_semantics<parallel>], iteration_bounds = array<i64: 1>, scalar_prefetch = 0 : i64, scratch_operands = 0 : i64, tpu.core_type = #tpu.core_type<tc>, window_params = [{transform_indices = @transform_0, window_bounds = array<i64: 16, 3>}, {pipeline_mode = #tpu.pipeline_mode<synchronous>, transform_indices = @transform_1, window_bounds = array<i64: 512, 128>}, {transform_indices = @transform_2, window_bounds = array<i64: 16, 128>}]} {
    %c0 = arith.constant 0 : index
    %c0_0 = arith.constant 0 : index
    %0 = vector.load %arg2[%c0, %c0_0] : memref<512x128xf32, #tpu.memory_space<vmem>>, vector<512x128xf32>
    %1 = tpu.iota {dimensions = array<i32: 1>} : vector<16x512xi32>
    %c0_1 = arith.constant 0 : index
    %c0_2 = arith.constant 0 : index
    %2 = vector.load %arg1[%c0_1, %c0_2] : memref<16x3xi32, #tpu.memory_space<vmem>>, vector<16x3xi32>
    %3 = vector.extract_strided_slice %2 {offsets = [0, 0], sizes = [16, 1], strides = [1, 1]} : vector<16x3xi32> to vector<16x1xi32>
    %4 = vector.extract_strided_slice %2 {offsets = [0, 1], sizes = [16, 1], strides = [1, 1]} : vector<16x3xi32> to vector<16x1xi32>
    %c51_i32 = arith.constant 51 : i32
    %5 = vector.broadcast %c51_i32 : i32 to vector<16x1xi32>
    %6 = arith.addi %4, %5 : vector<16x1xi32>
    %7 = vector.extract_strided_slice %2 {offsets = [0, 2], sizes = [16, 1], strides = [1, 1]} : vector<16x3xi32> to vector<16x1xi32>
    %c1_i32 = arith.constant 1 : i32
    %8 = vector.broadcast %c1_i32 : i32 to vector<16x1xi32>
    %9 = arith.subi %7, %8 : vector<16x1xi32>
    %c168_i32 = arith.constant 168 : i32
    %c0_i32 = arith.constant 0 : i32
    %10 = arith.cmpi eq, %c168_i32, %c0_i32 : i32
    %c1_i32_3 = arith.constant 1 : i32
    %11 = arith.select %10, %c1_i32_3, %c168_i32 : i32
    %12 = vector.broadcast %11 : i32 to vector<16x1xi32>
    %13 = arith.remsi %9, %12 : vector<16x1xi32>
    %c0_i32_4 = arith.constant 0 : i32
    %14 = vector.broadcast %c0_i32_4 : i32 to vector<16x1xi32>
    %15 = arith.cmpi ne, %13, %14 : vector<16x1xi32>
    %c0_i32_5 = arith.constant 0 : i32
    %16 = vector.broadcast %c0_i32_5 : i32 to vector<16x1xi32>
    %17 = arith.cmpi slt, %13, %16 : vector<16x1xi32>
    %c0_i32_6 = arith.constant 0 : i32
    %18 = arith.cmpi slt, %11, %c0_i32_6 : i32
    %19 = vector.broadcast %18 : i1 to vector<16x1xi1>
    %20 = vector.broadcast %19 : vector<16x1xi1> to vector<16x1xi1>
    %21 = arith.xori %17, %20 : vector<16x1xi1>
    %22 = arith.andi %21, %15 : vector<16x1xi1>
    %23 = vector.broadcast %11 : i32 to vector<16x1xi32>
    %24 = arith.addi %13, %23 : vector<16x1xi32>
    %25 = arith.select %22, %24, %13 : vector<16x1xi1>, vector<16x1xi32>
    %c1_i32_7 = arith.constant 1 : i32
    %26 = vector.broadcast %c1_i32_7 : i32 to vector<16x1xi32>
    %27 = arith.addi %25, %26 : vector<16x1xi32>
    %c252_i32 = arith.constant 252 : i32
    %28 = vector.broadcast %c252_i32 : i32 to vector<16x1xi32>
    %29 = arith.addi %27, %28 : vector<16x1xi32>
    %30 = vector.broadcast %3 : vector<16x1xi32> to vector<16x512xi32>
    %31 = arith.cmpi eq, %1, %30 : vector<16x512xi32>
    %32 = vector.broadcast %6 : vector<16x1xi32> to vector<16x512xi32>
    %33 = arith.cmpi eq, %1, %32 : vector<16x512xi32>
    %34 = arith.ori %31, %33 : vector<16x512xi1>
    %35 = vector.broadcast %29 : vector<16x1xi32> to vector<16x512xi32>
    %36 = arith.cmpi eq, %1, %35 : vector<16x512xi32>
    %37 = arith.ori %34, %36 : vector<16x512xi1>
    %38 = arith.extui %37 : vector<16x512xi1> to vector<16x512xi32>
    %39 = arith.sitofp %38 : vector<16x512xi32> to vector<16x512xf32>
    %cst = arith.constant dense<0.000000e+00> : vector<16x128xf32>
    %40 = tpu.matmul %39, %0, %cst {dimension_numbers = #tpu.dot_dimension_numbers<[1], [0], [0], [1], [0, 0, 1, 1], [], []>} : vector<16x512xf32>, vector<512x128xf32>, vector<16x128xf32> -> vector<16x128xf32>
    %c0_8 = arith.constant 0 : index
    %c0_9 = arith.constant 0 : index
    %41 = vector.load %arg3[%c0_8, %c0_9] : memref<16x128xf32, #tpu.memory_space<vmem>>, vector<16x128xf32>
    tpu.vector_store %arg3[%c0_8, %c0_9], %40 {strides = array<i32>} : memref<16x128xf32, #tpu.memory_space<vmem>>, vector<16x128xf32>,
    return
  }
  func.func @transform_0(%arg0: i32) -> (i32, i32) {
    %c0_i32 = arith.constant 0 : i32
    %c0_i32_0 = arith.constant 0 : i32
    return %arg0, %c0_i32 : i32, i32
  }
  func.func @transform_1(%arg0: i32) -> (i32, i32) {
    %c0_i32 = arith.constant 0 : i32
    %c0_i32_0 = arith.constant 0 : i32
    %c0_i32_1 = arith.constant 0 : i32
    return %c0_i32, %c0_i32_0 : i32, i32
  }
  func.func @transform_2(%arg0: i32) -> (i32, i32) {
    %c0_i32 = arith.constant 0 : i32
    %c0_i32_0 = arith.constant 0 : i32
    return %arg0, %c0_i32 : i32, i32
  }
}

</mosaic_0001>

<llo_original>
// kernel: tpu_custom_call.1
$region0: #{tpu_custom_call.1}
  #allocation0 [shape = 'u32[]', space=smem, size = 0x4, offset = 0x4, fixed_abs, tag = 'smem constant byte address 0x4 - core index']
  #allocation1 [shape = 'u32[144,128]{1,0:T(1,128)}', space=vmem, size = 0x12000, scoped, tag = 'internal scratch']
  %s0 = inlined_call_operand.vmem [shape: s32[16,3], index: 0, kind: input, shape index: {}]
  %s1 = inlined_call_operand.hbm [shape: f32[512,128], index: 1, kind: input, shape index: {}]
  %s2 = inlined_call_operand.hbm [shape: f32[16,128], index: 2, kind: output, shape index: {}]
  %s3 = sld [smem:[#allocation0]]
  $region22: #{tpu_custom_call.1} parent=0
    _
  %s5 = ssub.s32 1, %s3
  %s6 = scalar_select 0, %s5, %s3
  $region1: #{tpu_custom_call.1} parent=0
    #allocation2 [shape = 'u8[262144]{0}', space=vmem, size = 0x40000, scoped, tag = 'input window, operand 1, single buffered']
    #allocation3 [shape = 's32[1]{0}', space=sflag, size = 0x4, scoped, tag = 'scoped memory for tpu_custom_call.1']
    #allocation4 [shape = 's32[1]{0}', space=sflag, size = 0x4, scoped, tag = 'scoped memory for tpu_custom_call.1']
    #allocation5 [shape = 'u8[8192]{0}', space=vmem, size = 0x2000, scoped, tag = 'output window, operand 0, single buffered']
    %7 = vsyncpa [#allocation3], 0
    %8 = vsyncpa [#allocation4], 0
    // Predicated region
    $region2: #{tpu_custom_call.1} parent=1 // pred_check
      _
    $region3: #{tpu_custom_call.1} parent=1 // pred_check_branch
      %10 = sbr.rel (0) target = $region5
    $region4: #{tpu_custom_call.1} parent=1 // pred_region
      _
    $region5: #{tpu_custom_call.1} parent=1 // pred_fallthru
      _
    // Predicated region
    $region6: #{tpu_custom_call.1} parent=1 // pred_check
      _
    $region7: #{tpu_custom_call.1} parent=1 // pred_check_branch
      %12 = sbr.rel (0) target = $region9
    $region8: #{tpu_custom_call.1} parent=1 // pred_region
      %s14 = ssub.s32 8192, 8192
      %15 = vsyncadd [#allocation3], %s14
      %s16 = sshll.u32 [#allocation2], 4
      %s17 = int_to_ptr.vmem [resolvable:$true] %s16
      %22 = dma.hbm_to_vmem [thread:$0]  %s1, 8192, %s17, [#allocation3], 128, 128, 8
    $region9: #{tpu_custom_call.1} parent=1 // pred_fallthru
      _
    // Predicated region
    $region10: #{tpu_custom_call.1} parent=1 // pred_check
      _
    $region11: #{tpu_custom_call.1} parent=1 // pred_check_branch
      %24 = sbr.rel (0) target = $region13
    $region12: #{tpu_custom_call.1} parent=1 // pred_region
      %25 = dma.done [#allocation3], 8192
    $region13: #{tpu_custom_call.1} parent=1 // pred_fallthru
      _
    %v26 = vld [vmem:[#allocation2] sm:$0xff]
    %v27 = vld [vmem:[#allocation2 + $0x8] sm:$0xff]
    %v28 = vld [vmem:[#allocation2 + $0x10] sm:$0xff]
    %v29 = vld [vmem:[#allocation2 + $0x18] sm:$0xff]
    %v30 = vld [vmem:[#allocation2 + $0x20] sm:$0xff]
    %v31 = vld [vmem:[#allocation2 + $0x28] sm:$0xff]
    %v32 = vld [vmem:[#allocation2 + $0x30] sm:$0xff]
    %v33 = vld [vmem:[#allocation2 + $0x38] sm:$0xff]
    %v34 = vld [vmem:[#allocation2 + $0x40] sm:$0xff]
    %v35 = vld [vmem:[#allocation2 + $0x48] sm:$0xff]
    %v36 = vld [vmem:[#allocation2 + $0x50] sm:$0xff]
    %v37 = vld [vmem:[#allocation2 + $0x58] sm:$0xff]
    %v38 = vld [vmem:[#allocation2 + $0x60] sm:$0xff]
    %v39 = vld [vmem:[#allocation2 + $0x68] sm:$0xff]
    %v40 = vld [vmem:[#allocation2 + $0x70] sm:$0xff]
    %v41 = vld [vmem:[#allocation2 + $0x78] sm:$0xff]
    %v42 = vld [vmem:[#allocation2 + $0x80] sm:$0xff]
    %v43 = vld [vmem:[#allocation2 + $0x88] sm:$0xff]
    %v44 = vld [vmem:[#allocation2 + $0x90] sm:$0xff]
    %v45 = vld [vmem:[#allocation2 + $0x98] sm:$0xff]
    %v46 = vld [vmem:[#allocation2 + $0xa0] sm:$0xff]
    %v47 = vld [vmem:[#allocation2 + $0xa8] sm:$0xff]
    %v48 = vld [vmem:[#allocation2 + $0xb0] sm:$0xff]
    %v49 = vld [vmem:[#allocation2 + $0xb8] sm:$0xff]
    %v50 = vld [vmem:[#allocation2 + $0xc0] sm:$0xff]
    %v51 = vld [vmem:[#allocation2 + $0xc8] sm:$0xff]
    %v52 = vld [vmem:[#allocation2 + $0xd0] sm:$0xff]
    %v53 = vld [vmem:[#allocation2 + $0xd8] sm:$0xff]
    %v54 = vld [vmem:[#allocation2 + $0xe0] sm:$0xff]
    %v55 = vld [vmem:[#allocation2 + $0xe8] sm:$0xff]
    %v56 = vld [vmem:[#allocation2 + $0xf0] sm:$0xff]
    %v57 = vld [vmem:[#allocation2 + $0xf8] sm:$0xff]
    %v58 = vld [vmem:[#allocation2 + $0x100] sm:$0xff]
    %v59 = vld [vmem:[#allocation2 + $0x108] sm:$0xff]
    %v60 = vld [vmem:[#allocation2 + $0x110] sm:$0xff]
    %v61 = vld [vmem:[#allocation2 + $0x118] sm:$0xff]
    %v62 = vld [vmem:[#allocation2 + $0x120] sm:$0xff]
    %v63 = vld [vmem:[#allocation2 + $0x128] sm:$0xff]
    %v64 = vld [vmem:[#allocation2 + $0x130] sm:$0xff]
    %v65 = vld [vmem:[#allocation2 + $0x138] sm:$0xff]
    %v66 = vld [vmem:[#allocation2 + $0x140] sm:$0xff]
    %v67 = vld [vmem:[#allocation2 + $0x148] sm:$0xff]
    %v68 = vld [vmem:[#allocation2 + $0x150] sm:$0xff]
    %v69 = vld [vmem:[#allocation2 + $0x158] sm:$0xff]
    %v70 = vld [vmem:[#allocation2 + $0x160] sm:$0xff]
    %v71 = vld [vmem:[#allocation2 + $0x168] sm:$0xff]
    %v72 = vld [vmem:[#allocation2 + $0x170] sm:$0xff]
    %v73 = vld [vmem:[#allocation2 + $0x178] sm:$0xff]
    %v74 = vld [vmem:[#allocation2 + $0x180] sm:$0xff]
    %v75 = vld [vmem:[#allocation2 + $0x188] sm:$0xff]
    %v76 = vld [vmem:[#allocation2 + $0x190] sm:$0xff]
    %v77 = vld [vmem:[#allocation2 + $0x198] sm:$0xff]
    %v78 = vld [vmem:[#allocation2 + $0x1a0] sm:$0xff]
    %v79 = vld [vmem:[#allocation2 + $0x1a8] sm:$0xff]
    %v80 = vld [vmem:[#allocation2 + $0x1b0] sm:$0xff]
    %v81 = vld [vmem:[#allocation2 + $0x1b8] sm:$0xff]
    %v82 = vld [vmem:[#allocation2 + $0x1c0] sm:$0xff]
    %v83 = vld [vmem:[#allocation2 + $0x1c8] sm:$0xff]
    %v84 = vld [vmem:[#allocation2 + $0x1d0] sm:$0xff]
    %v85 = vld [vmem:[#allocation2 + $0x1d8] sm:$0xff]
    %v86 = vld [vmem:[#allocation2 + $0x1e0] sm:$0xff]
    %v87 = vld [vmem:[#allocation2 + $0x1e8] sm:$0xff]
    %v88 = vld [vmem:[#allocation2 + $0x1f0] sm:$0xff]
    %v89 = vld [vmem:[#allocation2 + $0x1f8] sm:$0xff]
    %v90 = vlaneseq
    %v91 = vand.u32 %v90, 127
    %v92 = vadd.s32 %v91, 128
    %v93 = vadd.s32 %v91, 256
    %v94 = vadd.s32 %v91, 384
    %v95 = vld [vmem:[%s0] sm:$0xff]
    %v96 = vld [vmem:[%s0 + $0x8] sm:$0xff]
    %v97 = vadd.s32 %v95, 51
    %v98 = vadd.s32 %v96, 51
    %v99 = vsub.s32 %v95, 1
    %v100 = vsub.s32 %v96, 1
    %vm101 = vcmp.lt.s32.totalorder %v99, 0
    %v102 = vsub.s32 0, %v99
    %v103 = vsel %vm101, %v102, %v99
    %v104 = vmul.u32.u64.compose %v103, 3272356035
    %v105 = vextract.low.u32 %v104
    %v106 = vextract.high.u32 %v104
    %vm107 = vc.u32 %v105, 3272356035
    %v108 = vsel %vm107, 1, 0
    %v109 = vadd.s32 %v106, %v108
    %v110 = vshrl.u32 %v109, 7
    %v111 = vmul.u32 %v110, 168
    %v112 = vsub.s32 %v103, %v111
    %v113 = vsub.s32 0, %v112
    %v114 = vsel %vm101, %v113, %v112
    %vm115 = vcmp.lt.s32.totalorder %v100, 0
    %v116 = vsub.s32 0, %v100
    %v117 = vsel %vm115, %v116, %v100
    %v118 = vmul.u32.u64.compose %v117, 3272356035
    %v119 = vextract.low.u32 %v118
    %v120 = vextract.high.u32 %v118
    %vm121 = vc.u32 %v119, 3272356035
    %v122 = vsel %vm121, 1, 0
    %v123 = vadd.s32 %v120, %v122
    %v124 = vshrl.u32 %v123, 7
    %v125 = vmul.u32 %v124, 168
    %v126 = vsub.s32 %v117, %v125
    %v127 = vsub.s32 0, %v126
    %v128 = vsel %vm115, %v127, %v126
    %vm129 = vcmp.ne.s32.totalorder %v114, 0
    %vm130 = vcmp.ne.s32.totalorder %v128, 0
    %vm131 = vcmp.lt.s32.totalorder %v114, 0
    %vm132 = vcmp.lt.s32.totalorder %v128, 0
    %vm133 = vmand %vm131, %vm129
    %vm134 = vmand %vm132, %vm130
    %v135 = vadd.s32 %v114, 168
    %v136 = vadd.s32 %v128, 168
    %v137 = vsel %vm133, %v135, %v114
    %v138 = vsel %vm134, %v136, %v128
    %v139 = vadd.s32 %v137, 1
    %v140 = vadd.s32 %v138, 1
    %v141 = vadd.s32 %v139, 252
    %v142 = vadd.s32 %v140, 252
    %143 = vset.pattern.permute.xlu0 0
    %144 = vperm.xlu0 %143, %v95
    %v145 = vpop.permute.xlu0 %144
    %146 = vset.pattern.permute.xlu0 0
    %147 = vperm.xlu0 %146, %v96
    %v148 = vpop.permute.xlu0 %147
    %vm149 = vcmp.eq.s32.totalorder %v91, %v145
    %vm150 = vcmp.eq.s32.totalorder %v92, %v145
    %vm151 = vcmp.eq.s32.totalorder %v93, %v145
    %vm152 = vcmp.eq.s32.totalorder %v94, %v145
    %vm153 = vcmp.eq.s32.totalorder %v91, %v148
    %vm154 = vcmp.eq.s32.totalorder %v92, %v148
    %vm155 = vcmp.eq.s32.totalorder %v93, %v148
    %vm156 = vcmp.eq.s32.totalorder %v94, %v148
    %157 = vset.pattern.permute.xlu0 1
    %158 = vperm.xlu0 %157, %v97
    %v159 = vpop.permute.xlu0 %158
    %160 = vset.pattern.permute.xlu0 1
    %161 = vperm.xlu0 %160, %v98
    %v162 = vpop.permute.xlu0 %161
    %vm163 = vcmp.eq.s32.totalorder %v91, %v159
    %vm164 = vcmp.eq.s32.totalorder %v92, %v159
    %vm165 = vcmp.eq.s32.totalorder %v93, %v159
    %vm166 = vcmp.eq.s32.totalorder %v94, %v159
    %vm167 = vcmp.eq.s32.totalorder %v91, %v162
    %vm168 = vcmp.eq.s32.totalorder %v92, %v162
    %vm169 = vcmp.eq.s32.totalorder %v93, %v162
    %vm170 = vcmp.eq.s32.totalorder %v94, %v162
    %vm171 = vmor %vm149, %vm163
    %vm172 = vmor %vm150, %vm164
    %vm173 = vmor %vm151, %vm165
    %vm174 = vmor %vm152, %vm166
    %vm175 = vmor %vm153, %vm167
    %vm176 = vmor %vm154, %vm168
    %vm177 = vmor %vm155, %vm169
    %vm178 = vmor %vm156, %vm170
    %179 = vset.pattern.permute.xlu0 2
    %180 = vperm.xlu0 %179, %v141
    %v181 = vpop.permute.xlu0 %180
    %182 = vset.pattern.permute.xlu0 2
    %183 = vperm.xlu0 %182, %v142
    %v184 = vpop.permute.xlu0 %183
    %vm185 = vcmp.eq.s32.totalorder %v91, %v181
    %vm186 = vcmp.eq.s32.totalorder %v92, %v181
    %vm187 = vcmp.eq.s32.totalorder %v93, %v181
    %vm188 = vcmp.eq.s32.totalorder %v94, %v181
    %vm189 = vcmp.eq.s32.totalorder %v91, %v184
    %vm190 = vcmp.eq.s32.totalorder %v92, %v184
    %vm191 = vcmp.eq.s32.totalorder %v93, %v184
    %vm192 = vcmp.eq.s32.totalorder %v94, %v184
    %vm193 = vmor %vm171, %vm185
    %vm194 = vmor %vm172, %vm186
    %vm195 = vmor %vm173, %vm187
    %vm196 = vmor %vm174, %vm188
    %vm197 = vmor %vm175, %vm189
    %vm198 = vmor %vm176, %vm190
    %vm199 = vmor %vm177, %vm191
    %vm200 = vmor %vm178, %vm192
    %v201 = vsel %vm193, 1, 0
    %v202 = vsel %vm194, 1, 0
    %v203 = vsel %vm195, 1, 0
    %v204 = vsel %vm196, 1, 0
    %v205 = vsel %vm197, 1, 0
    %v206 = vsel %vm198, 1, 0
    %v207 = vsel %vm199, 1, 0
    %v208 = vsel %vm200, 1, 0
    %v209 = vcvt.s32.f32 %v201
    %v210 = vcvt.s32.f32 %v202
    %v211 = vcvt.s32.f32 %v203
    %v212 = vcvt.s32.f32 %v204
    %v213 = vcvt.s32.f32 %v205
    %v214 = vcvt.s32.f32 %v206
    %v215 = vcvt.s32.f32 %v207
    %v216 = vcvt.s32.f32 %v208
    %217 = vmatprep.subr.mxu0 0.0
    %218 = vmatpush1.msra.mxu0 %v41
    %219 = vmatprep.subr.mxu0 0.0
    %220 = vmatpush1.msra.mxu0 %v40
    %221 = vmatprep.subr.mxu0 0.0
    %222 = vmatpush1.msra.mxu0 %v39
    %223 = vmatprep.subr.mxu0 0.0
    %224 = vmatpush1.msra.mxu0 %v38
    %225 = vmatprep.subr.mxu0 0.0
    %226 = vmatpush1.msra.mxu0 %v37
    %227 = vmatprep.subr.mxu0 0.0
    %228 = vmatpush1.msra.mxu0 %v36
    %229 = vmatprep.subr.mxu0 0.0
    %230 = vmatpush1.msra.mxu0 %v35
    %231 = vmatprep.subr.mxu0 0.0
    %232 = vmatpush1.msra.mxu0 %v34
    %233 = vmatprep.subr.mxu0 0.0
    %234 = vmatpush1.msra.mxu0 %v33
    %235 = vmatprep.subr.mxu0 0.0
    %236 = vmatpush1.msra.mxu0 %v32
    %237 = vmatprep.subr.mxu0 0.0
    %238 = vmatpush1.msra.mxu0 %v31
    %239 = vmatprep.subr.mxu0 0.0
    %240 = vmatpush1.msra.mxu0 %v30
    %241 = vmatprep.subr.mxu0 0.0
    %242 = vmatpush1.msra.mxu0 %v29
    %243 = vmatprep.subr.mxu0 0.0
    %244 = vmatpush1.msra.mxu0 %v28
    %245 = vmatprep.subr.mxu0 0.0
    %246 = vmatpush1.msra.mxu0 %v27
    %247 = vmatprep.subr.mxu0 0.0
    %248 = vmatpush1.msra.mxu0 %v26
    %249 = vmatprep.subr.mxu0 0.0
    %250 = vmatpush2.msra.mxu0 %v57
    %251 = vmatprep.subr.mxu0 0.0
    %252 = vmatpush2.msra.mxu0 %v56
    %253 = vmatprep.subr.mxu0 0.0
    %254 = vmatpush2.msra.mxu0 %v55
    %255 = vmatprep.subr.mxu0 0.0
    %256 = vmatpush2.msra.mxu0 %v54
    %257 = vmatprep.subr.mxu0 0.0
    %258 = vmatpush2.msra.mxu0 %v53
    %259 = vmatprep.subr.mxu0 0.0
    %260 = vmatpush2.msra.mxu0 %v52
    %261 = vmatprep.subr.mxu0 0.0
    %262 = vmatpush2.msra.mxu0 %v51
    %263 = vmatprep.subr.mxu0 0.0
    %264 = vmatpush2.msra.mxu0 %v50
    %265 = vmatprep.subr.mxu0 0.0
    %266 = vmatpush2.msra.mxu0 %v49
    %267 = vmatprep.subr.mxu0 0.0
    %268 = vmatpush2.msra.mxu0 %v48
    %269 = vmatprep.subr.mxu0 0.0
    %270 = vmatpush2.msra.mxu0 %v47
    %271 = vmatprep.subr.mxu0 0.0
    %272 = vmatpush2.msra.mxu0 %v46
    %273 = vmatprep.subr.mxu0 0.0
    %274 = vmatpush2.msra.mxu0 %v45
    %275 = vmatprep.subr.mxu0 0.0
    %276 = vmatpush2.msra.mxu0 %v44
    %277 = vmatprep.subr.mxu0 0.0
    %278 = vmatpush2.msra.mxu0 %v43
    %279 = vmatprep.subr.mxu0 0.0
    %280 = vmatpush2.msra.mxu0 %v42
    %281 = vmatprep.mubr.f32.mxu0 %v210
    %282 = vmatmul.mubr.f32.gmra.mxu0 %v209
    %v283 = vpop.f32.mrf.mxu0
    %v284 = vadd.f32 0.0, %v283
    %v285 = vpop.f32.mrf.mxu0
    %286 = vmatprep.mubr.f32.mxu0 %v214
    %287 = vmatmul.mubr.f32.gmra.mxu0 %v213
    %v288 = vpop.f32.mrf.mxu0
    %v289 = vadd.f32 0.0, %v288
    %v290 = vpop.f32.mrf.mxu0
    %291 = vdwg.mxu0
    %292 = vmatprep.subr.mxu0 0.0
    %293 = vmatpush1.msra.mxu0 %v73
    %294 = vmatprep.subr.mxu0 0.0
    %295 = vmatpush1.msra.mxu0 %v72
    %296 = vmatprep.subr.mxu0 0.0
    %297 = vmatpush1.msra.mxu0 %v71
    %298 = vmatprep.subr.mxu0 0.0
    %299 = vmatpush1.msra.mxu0 %v70
    %300 = vmatprep.subr.mxu0 0.0
    %301 = vmatpush1.msra.mxu0 %v69
    %302 = vmatprep.subr.mxu0 0.0
    %303 = vmatpush1.msra.mxu0 %v68
    %304 = vmatprep.subr.mxu0 0.0
    %305 = vmatpush1.msra.mxu0 %v67
    %306 = vmatprep.subr.mxu0 0.0
    %307 = vmatpush1.msra.mxu0 %v66
    %308 = vmatprep.subr.mxu0 0.0
    %309 = vmatpush1.msra.mxu0 %v65
    %310 = vmatprep.subr.mxu0 0.0
    %311 = vmatpush1.msra.mxu0 %v64
    %312 = vmatprep.subr.mxu0 0.0
    %313 = vmatpush1.msra.mxu0 %v63
    %314 = vmatprep.subr.mxu0 0.0
    %315 = vmatpush1.msra.mxu0 %v62
    %316 = vmatprep.subr.mxu0 0.0
    %317 = vmatpush1.msra.mxu0 %v61
    %318 = vmatprep.subr.mxu0 0.0
    %319 = vmatpush1.msra.mxu0 %v60
    %320 = vmatprep.subr.mxu0 0.0
    %321 = vmatpush1.msra.mxu0 %v59
    %322 = vmatprep.subr.mxu0 0.0
    %323 = vmatpush1.msra.mxu0 %v58
    %324 = vmatprep.subr.mxu0 0.0
    %325 = vmatpush2.msra.mxu0 %v89
    %326 = vmatprep.subr.mxu0 0.0
    %327 = vmatpush2.msra.mxu0 %v88
    %328 = vmatprep.subr.mxu0 0.0
    %329 = vmatpush2.msra.mxu0 %v87
    %330 = vmatprep.subr.mxu0 0.0
    %331 = vmatpush2.msra.mxu0 %v86
    %332 = vmatprep.subr.mxu0 0.0
    %333 = vmatpush2.msra.mxu0 %v85
    %334 = vmatprep.subr.mxu0 0.0
    %335 = vmatpush2.msra.mxu0 %v84
    %336 = vmatprep.subr.mxu0 0.0
    %337 = vmatpush2.msra.mxu0 %v83
    %338 = vmatprep.subr.mxu0 0.0
    %339 = vmatpush2.msra.mxu0 %v82
    %340 = vmatprep.subr.mxu0 0.0
    %341 = vmatpush2.msra.mxu0 %v81
    %342 = vmatprep.subr.mxu0 0.0
    %343 = vmatpush2.msra.mxu0 %v80
    %344 = vmatprep.subr.mxu0 0.0
    %345 = vmatpush2.msra.mxu0 %v79
    %346 = vmatprep.subr.mxu0 0.0
    %347 = vmatpush2.msra.mxu0 %v78
    %348 = vmatprep.subr.mxu0 0.0
    %349 = vmatpush2.msra.mxu0 %v77
    %350 = vmatprep.subr.mxu0 0.0
    %351 = vmatpush2.msra.mxu0 %v76
    %352 = vmatprep.subr.mxu0 0.0
    %353 = vmatpush2.msra.mxu0 %v75
    %354 = vmatprep.subr.mxu0 0.0
    %355 = vmatpush2.msra.mxu0 %v74
    %356 = vmatprep.mubr.f32.mxu0 %v212
    %357 = vmatmul.mubr.f32.gmra.mxu0 %v211
    %v358 = vpop.f32.mrf.mxu0
    %v359 = vadd.f32 %v284, %v358
    %v360 = vpop.f32.mrf.mxu0
    %361 = vmatprep.mubr.f32.mxu0 %v216
    %362 = vmatmul.mubr.f32.gmra.mxu0 %v215
    %v363 = vpop.f32.mrf.mxu0
    %v364 = vadd.f32 %v289, %v363
    %v365 = vpop.f32.mrf.mxu0
    %366 = vdwg.mxu0
    %367 = vst [vmem:[#allocation5] sm:$0xff] %v359
    %368 = vst [vmem:[#allocation5 + $0x8] sm:$0xff] %v364
    // Predicated region
    $region14: #{tpu_custom_call.1} parent=1 // pred_check
      _
    $region15: #{tpu_custom_call.1} parent=1 // pred_check_branch
      %370 = sbr.rel (0) target = $region17
    $region16: #{tpu_custom_call.1} parent=1 // pred_region
      %s372 = ssub.s32 256, 256
      %373 = vsyncadd [#allocation4], %s372
      %s374 = sshll.u32 [#allocation5], 4
      %s375 = int_to_ptr.vmem [resolvable:$true] %s374
      %380 = dma.vmem_to_hbm [thread:$0]  %s375, 256, %s2, [#allocation4], 128, 128, 8
    $region17: #{tpu_custom_call.1} parent=1 // pred_fallthru
      _
    // Predicated region
    $region18: #{tpu_custom_call.1} parent=1 // pred_check
      _
    $region19: #{tpu_custom_call.1} parent=1 // pred_check_branch
      %382 = sbr.rel (0) target = $region21
    $region20: #{tpu_custom_call.1} parent=1 // pred_region
      %383 = dma.done [#allocation4], 256
    $region21: #{tpu_custom_call.1} parent=1 // pred_fallthru
      _
    %384 = vsyncpa [#allocation3], 1
    %385 = vsyncpa [#allocation4], 1

</llo_original>
